<compile_context>
chip_gen: v5e
topology: v5e:2x2
jax: 0.10.0
libtpu: 0.0.40
codegen_flags: <defaults>
</compile_context>

<pallas_src>
import jax
import jax.numpy as jnp
from jax import lax
from jax.experimental import pallas as pl
from jax.experimental.pallas import tpu as pltpu


def _round_up(x, m):
    return ((x + m - 1) // m) * m


def _vmem_capacity_bytes():
    """Physical VMEM of the current TPU generation (conservative fallback)."""
    try:
        info = pltpu.get_tpu_info()
        cap = getattr(info, "vmem_capacity_bytes", None)
        if cap:
            return int(cap)
    except Exception:
        pass
    return 64 << 20  # v7x per-TensorCore VMEM: the smallest of v5e/v6e/v7x


_TILE_CANDIDATES = (4096, 2048, 1024, 512, 256, 128)


def _choose_tile_n(N, c_pad, x_itemsize, mm_itemsize, budget):
    """Spatial tile for the two-pass fallback.

    No divisibility cliff: any lane-aligned candidate is allowed (N is padded
    up to the chosen tile).  Candidates are filtered by a double-buffered VMEM
    footprint budget and scored by padded HBM traffic plus the per-grid-step
    overhead expressed in equivalent output columns.
    """
    per_col_bytes = max(c_pad * 2 * x_itemsize, 1)          # read x + write out
    overhead_cols = max(int(0.35e-6 * 1.3e12 / per_col_bytes), 1)
    best = None
    for cand in _TILE_CANDIDATES:
        tile_bytes = c_pad * cand * x_itemsize
        att_bytes = c_pad * c_pad * mm_itemsize
        temp_bytes = c_pad * cand * (4 + mm_itemsize)
        need = 4 * tile_bytes + 2 * att_bytes + temp_bytes + (2 << 20)
        if need > budget and cand != 128:
            continue
        n_pad = _round_up(N, cand)
        steps = n_pad // cand
        cost = n_pad + steps * overhead_cols
        if best is None or cost < best[0]:
            best = (cost, cand, n_pad)
    return best[1], best[2]


def _softmax_attention(energy, C, c_pad, gamma_scalar, out_dtype):
    """(gamma * softmax(rowmax(E) - E)) computed as gamma * exp(rowmin - E)/sum,
    with padded channel columns masked out.  `energy` is (c_pad, c_pad) f32."""
    if c_pad != C:
        col = lax.broadcasted_iota(jnp.int32, (c_pad, c_pad), 1)
        valid = col < C
        energy = jnp.where(valid, energy, jnp.inf)
    rmin = jnp.min(energy, axis=-1, keepdims=True)
    e = jnp.exp(rmin - energy)
    if c_pad != C:
        e = jnp.where(valid, e, 0.0)
    denom = jnp.sum(e, axis=-1, keepdims=True)
    # Runs once per batch in a finalize branch (not the hot loop): exact
    # division is essentially free here.
    att = e * pl.reciprocal(denom, approx=False)
    # Fold gamma into the attention: gamma*(A@X) == (gamma*A)@X, so the apply
    # epilogue is a single add.
    return (gamma_scalar * att).astype(out_dtype)


def cam_module_forward(x, gamma, *, matmul_dtype=jnp.bfloat16,
                       force_two_pass=False):
    """Channel-attention forward.

    x:      (B, C, H, W)
    gamma:  scalar / shape-(1,) parameter (the module's self.gamma)
    matmul_dtype: MXU operand dtype for both matmuls (accumulation is always
        f32).  Defaults to bf16 (full MXU rate + half the operand traffic);
        pass jnp.float32 for a numerically tight path.
    force_two_pass: force the N-tiled two-kernel fallback (testing hook).
    """
    B, C, H, W = x.shape
    N = H * W
    matmul_dtype = jnp.dtype(matmul_dtype)
    x_itemsize = x.dtype.itemsize
    mm_itemsize = matmul_dtype.itemsize

    # Pad channels to a full lane: lane-dense (c_pad, c_pad) attention
    # (unmasked stores, full MXU K edge) and valid sub-32-bit packing.
    c_pad = _round_up(C, 128)

    cap = _vmem_capacity_bytes()

    # ---- fused (single HBM pass over X) vs two-pass fallback decision -----
    n_pad_fused = _round_up(N, 128)
    chunk = next(c for c in (1024, 512, 256, 128) if n_pad_fused % c == 0)
    slab_bytes = c_pad * n_pad_fused * x_itemsize
    fused_need = (4 * slab_bytes                          # 2x in + 2x out slabs (double-buffered)
                  + c_pad * c_pad * (4 + mm_itemsize)     # f32 energy acc + attention scratch
                  + c_pad * chunk * (8 + 2 * mm_itemsize) # per-chunk temporaries
                  + (2 << 20))
    use_fused = (not force_two_pass) and fused_need <= int(0.80 * cap)

    if use_fused:
        n_pad = n_pad_fused
    else:
        budget = min(int(0.45 * cap), 60 << 20)
        tile_n, n_pad = _choose_tile_n(N, c_pad, x_itemsize, mm_itemsize, budget)
        num_n_tiles = n_pad // tile_n

    gamma_smem = jnp.asarray(gamma, jnp.float32).reshape(1)
    x_flat = x.reshape(B, C, N)
    if (c_pad, n_pad) != (C, N):
        # Padded spatial columns contribute 0 to energy / produce 0 output
        # columns; padded channels are masked inside the softmax and sliced
        # off at the end.
        # TODO(synk): for large unaligned inputs this jnp.pad materializes a
        # padded HBM copy; masking the ragged edges in-kernel would avoid it.
        x_flat = jnp.pad(x_flat, ((0, 0), (0, c_pad - C), (0, n_pad - N)))

    if use_fused:
        # ------------------------------------------------------------------
        # Fused path: grid (B,), whole (c_pad, n_pad) slab resident in VMEM.
        # ------------------------------------------------------------------
        num_chunks = n_pad // chunk
        vmem_limit = int(min(max(fused_need + (2 << 20), 24 << 20),
                             int(0.90 * cap)))

        def fused_kernel(gamma_ref, x_ref, out_ref, eacc_ref, att_ref):
            # x_ref/out_ref: (c_pad, n_pad); eacc_ref: (c_pad, c_pad) f32;
            # att_ref: (c_pad, c_pad) matmul_dtype.

            def _over_chunks(body):
                if num_chunks <= 32:
                    # Static unroll: static slices, full LLO visibility.
                    for i in range(num_chunks):
                        body(i * chunk)
                else:
                    def step(i, carry):
                        body(pl.multiple_of(i * chunk, chunk))
                        return carry
                    lax.fori_loop(0, num_chunks, step, 0)

            # --- energy = sum over chunks of X_c @ X_c^T (f32 accumulation) ---
            eacc_ref[...] = jnp.zeros_like(eacc_ref)

            def energy_body(start):
                xc = x_ref[:, pl.ds(start, chunk)].astype(matmul_dtype)
                # NT-style contraction on the lane dim: no materialized
                # transpose of the X chunk.
                eacc_ref[...] += lax.dot_general(
                    xc, xc,
                    dimension_numbers=(((1,), (1,)), ((), ())),
                    preferred_element_type=jnp.float32)

            _over_chunks(energy_body)

            # --- softmax + gamma fold, kept in VMEM in matmul dtype ---
            att_ref[...] = _softmax_attention(
                eacc_ref[...], C, c_pad, gamma_ref[0], att_ref.dtype)

            # --- out_chunk = (gamma*A) @ X_chunk + X_chunk ---
            def apply_body(start):
                xc = x_ref[:, pl.ds(start, chunk)]
                o = jnp.dot(att_ref[...], xc.astype(matmul_dtype),
                            preferred_element_type=jnp.float32)
                out_ref[:, pl.ds(start, chunk)] = (
                    o + xc.astype(jnp.float32)).astype(out_ref.dtype)

            _over_chunks(apply_body)

        out_flat = pl.pallas_call(
            fused_kernel,
            out_shape=jax.ShapeDtypeStruct((B, c_pad, n_pad), x.dtype),
            grid_spec=pltpu.PrefetchScalarGridSpec(
                num_scalar_prefetch=0,
                grid=(B,),
                in_specs=[
                    pl.BlockSpec(memory_space=pltpu.MemorySpace.SMEM),      # gamma
                    pl.BlockSpec((None, c_pad, n_pad), lambda b: (b, 0, 0)),
                ],
                out_specs=pl.BlockSpec((None, c_pad, n_pad), lambda b: (b, 0, 0)),
                scratch_shapes=[
                    pltpu.VMEM((c_pad, c_pad), jnp.float32),   # energy accumulator
                    pltpu.VMEM((c_pad, c_pad), matmul_dtype),  # gamma * attention
                ],
            ),
            compiler_params=pltpu.CompilerParams(
                # TODO(synk): on v7x with B == 1 a single TensorCore does all
                # the work; an N-split with a cross-core partial-energy combine
                # would engage the second core.
                dimension_semantics=("parallel",),
                vmem_limit_bytes=vmem_limit,
            ),
        )(gamma_smem, x_flat)

    else:
        # ------------------------------------------------------------------
        # Two-pass fallback: N-tiled energy reduction + N-tiled apply.
        # ------------------------------------------------------------------
        att_dtype = matmul_dtype
        tile_bytes = c_pad * tile_n * x_itemsize
        att_bytes = c_pad * c_pad * mm_itemsize
        need = (6 * tile_bytes + 3 * att_bytes + c_pad * c_pad * 4
                + c_pad * tile_n * (4 + mm_itemsize) + (4 << 20))
        vmem_limit = int(min(max(need, 24 << 20), int(0.90 * cap)))

        # Kernel 1: energy accumulated in an f32 VMEM scratch over the
        # "arbitrary" N axis; finalize emits (gamma * softmax) in matmul dtype.
        def energy_kernel(gamma_ref, x_ref, att_ref, eacc_ref):
            n_idx = pl.program_id(1)

            @pl.when(n_idx == 0)
            def _():
                eacc_ref[...] = jnp.zeros_like(eacc_ref)

            xm = x_ref[...].astype(matmul_dtype)       # (c_pad, tile_n)
            eacc_ref[...] += lax.dot_general(
                xm, xm,
                dimension_numbers=(((1,), (1,)), ((), ())),
                preferred_element_type=jnp.float32)

            @pl.when(n_idx == pl.num_programs(1) - 1)
            def _():
                att_ref[...] = _softmax_attention(
                    eacc_ref[...], C, c_pad, gamma_ref[0], att_ref.dtype)

        attention = pl.pallas_call(
            energy_kernel,
            out_shape=jax.ShapeDtypeStruct((B, c_pad, c_pad), att_dtype),
            grid_spec=pltpu.PrefetchScalarGridSpec(
                num_scalar_prefetch=0,
                grid=(B, num_n_tiles),
                in_specs=[
                    pl.BlockSpec(memory_space=pltpu.MemorySpace.SMEM),           # gamma
                    pl.BlockSpec((None, c_pad, tile_n), lambda b, n: (b, 0, n)),
                ],
                out_specs=pl.BlockSpec((None, c_pad, c_pad), lambda b, n: (b, 0, 0)),
                scratch_shapes=[pltpu.VMEM((c_pad, c_pad), jnp.float32)],
            ),
            compiler_params=pltpu.CompilerParams(
                dimension_semantics=("parallel", "arbitrary"),
                vmem_limit_bytes=vmem_limit,
            ),
        )(gamma_smem, x_flat)

        # Kernel 2: out_tile = (gamma*A) @ X_tile + X_tile.  attention already
        # stored in matmul dtype -> no per-tile (C, C) cast.
        def apply_kernel(att_ref, x_ref, out_ref):
            x_tile = x_ref[...]                          # (c_pad, tile_n)
            o = jnp.dot(att_ref[...], x_tile.astype(matmul_dtype),
                        preferred_element_type=jnp.float32)
            out_ref[...] = (o + x_tile.astype(jnp.float32)).astype(out_ref.dtype)

        out_flat = pl.pallas_call(
            apply_kernel,
            out_shape=jax.ShapeDtypeStruct((B, c_pad, n_pad), x.dtype),
            grid_spec=pltpu.PrefetchScalarGridSpec(
                num_scalar_prefetch=0,
                grid=(B, num_n_tiles),
                in_specs=[
                    pl.BlockSpec((None, c_pad, c_pad), lambda b, n: (b, 0, 0)),
                    pl.BlockSpec((None, c_pad, tile_n), lambda b, n: (b, 0, n)),
                ],
                out_specs=pl.BlockSpec((None, c_pad, tile_n), lambda b, n: (b, 0, n)),
            ),
            compiler_params=pltpu.CompilerParams(
                dimension_semantics=("parallel", "parallel"),
                vmem_limit_bytes=vmem_limit,
            ),
        )(attention, x_flat)

    return out_flat[:, :C, :N].reshape(B, C, H, W)


def cam_module_ref(x, gamma):
    """Pure-JAX reference mirroring the PyTorch forward."""
    B, C, H, W = x.shape
    X = x.reshape(B, C, -1)
    energy = jnp.einsum("bcn,bdn->bcd", X, X)
    energy_new = jnp.max(energy, axis=-1, keepdims=True) - energy
    attention = jax.nn.softmax(energy_new, axis=-1)
    out = jnp.einsum("bcd,bdn->bcn", attention, X).reshape(B, C, H, W)
    return jnp.asarray(gamma).reshape(()) * out + x


if __name__ == "__main__":
    key = jax.random.PRNGKey(0)
    B, C, H, W = 2, 4, 16, 16
    x = 0.25 * jax.random.normal(key, (B, C, H, W), dtype=jnp.float32)

    gamma_zero = jnp.zeros((1,), jnp.float32)     # module's initial gamma
    gamma_test = jnp.asarray([0.5], jnp.float32)  # exercise the attention path

    ref0 = cam_module_ref(x, gamma_zero)
    ref1 = cam_module_ref(x, gamma_test)

    # gamma = 0: output must reduce to the identity (residual only), even on
    # the default bf16 matmul path (the zero gamma is folded into attention).
    out0 = jax.block_until_ready(cam_module_forward(x, gamma_zero))
    assert jnp.allclose(out0, ref0, atol=1e-6, rtol=0.0)

    # Fused path, f32 MXU operands: tight check against the reference.
    out_f32 = jax.block_until_ready(
        cam_module_forward(x, gamma_test, matmul_dtype=jnp.float32))
    assert jnp.allclose(out_f32, ref1, atol=1e-3, rtol=1e-3)

    # Fused path, default bf16 MXU operands (f32 accumulation): loose check
    # documents bf16 quantization only; functional correctness is the f32 one.
    out_bf16 = jax.block_until_ready(cam_module_forward(x, gamma_test))
    assert jnp.allclose(out_bf16, ref1, atol=5e-2, rtol=5e-2)

    # Two-pass fallback path (exercised explicitly at small shapes).
    out_tp_f32 = jax.block_until_ready(
        cam_module_forward(x, gamma_test, matmul_dtype=jnp.float32,
                           force_two_pass=True))
    assert jnp.allclose(out_tp_f32, ref1, atol=1e-3, rtol=1e-3)

    out_tp_bf16 = jax.block_until_ready(
        cam_module_forward(x, gamma_test, force_two_pass=True))
    assert jnp.allclose(out_tp_bf16, ref1, atol=5e-2, rtol=5e-2)

    print("KERNEL_OK")
</pallas_src>

<mosaic_0001>
module attributes {stable_mosaic.version = 11 : i64} {
  func.func @fused_kernel(%arg0: i32, %arg1: memref<1xf32, #tpu.memory_space<smem>>, %arg2: memref<1x128x256xf32, #tpu.memory_space<vmem>>, %arg3: memref<1x128x256xf32, #tpu.memory_space<vmem>>, %arg4: memref<128x128xf32, #tpu.memory_space<vmem>>, %arg5: memref<128x128xbf16, #tpu.memory_space<vmem>>) attributes {dimension_semantics = [#tpu.dimension_semantics<parallel>], iteration_bounds = array<i64: 2>, scalar_prefetch = 0 : i64, scratch_operands = 2 : i64, tpu.core_type = #tpu.core_type<tc>, window_params = [{transform_indices = @transform_0, window_bounds = array<i64: 1>}, {transform_indices = @transform_1, window_bounds = array<i64: 1, 128, 256>}, {transform_indices = @transform_2, window_bounds = array<i64: 1, 128, 256>}]} {
    %cst = arith.constant 0.000000e+00 : f32
    %0 = vector.broadcast %cst : f32 to vector<128x128xf32>
    %c0 = arith.constant 0 : index
    %c0_0 = arith.constant 0 : index
    %1 = vector.load %arg4[%c0, %c0_0] : memref<128x128xf32, #tpu.memory_space<vmem>>, vector<128x128xf32>
    tpu.vector_store %arg4[%c0, %c0_0], %0 {strides = array<i32>} : memref<128x128xf32, #tpu.memory_space<vmem>>, vector<128x128xf32>,
    %c0_1 = arith.constant 0 : index
    %c0_2 = arith.constant 0 : index
    %c0_3 = arith.constant 0 : index
    %2 = vector.load %arg2[%c0_1, %c0_2, %c0_3] : memref<1x128x256xf32, #tpu.memory_space<vmem>>, vector<1x128x256xf32>
    %3 = vector.shape_cast %2 : vector<1x128x256xf32> to vector<128x256xf32>
    %4 = arith.truncf %3 : vector<128x256xf32> to vector<128x256xbf16>
    %c0_4 = arith.constant 0 : index
    %c0_5 = arith.constant 0 : index
    %5 = vector.load %arg4[%c0_4, %c0_5] : memref<128x128xf32, #tpu.memory_space<vmem>>, vector<128x128xf32>
    %cst_6 = arith.constant dense<0.000000e+00> : vector<128x128xf32>
    %6 = tpu.matmul %4, %4, %cst_6 {dimension_numbers = #tpu.dot_dimension_numbers<[1], [1], [0], [0], [0, 0, 1, 0], [], []>} : vector<128x256xbf16>, vector<128x256xbf16>, vector<128x128xf32> -> vector<128x128xf32>
    %7 = arith.addf %5, %6 : vector<128x128xf32>
    %c0_7 = arith.constant 0 : index
    %c0_8 = arith.constant 0 : index
    %8 = vector.load %arg4[%c0_7, %c0_8] : memref<128x128xf32, #tpu.memory_space<vmem>>, vector<128x128xf32>
    tpu.vector_store %arg4[%c0_7, %c0_8], %7 {strides = array<i32>} : memref<128x128xf32, #tpu.memory_space<vmem>>, vector<128x128xf32>,
    %c0_9 = arith.constant 0 : index
    %c0_10 = arith.constant 0 : index
    %9 = vector.load %arg4[%c0_9, %c0_10] : memref<128x128xf32, #tpu.memory_space<vmem>>, vector<128x128xf32>
    %c0_11 = arith.constant 0 : index
    %10 = memref.load %arg1[%c0_11] : memref<1xf32, #tpu.memory_space<smem>>
    %11 = tpu.iota {dimensions = array<i32: 1>} : vector<128x128xi32>
    %c4_i32 = arith.constant 4 : i32
    %12 = vector.broadcast %c4_i32 : i32 to vector<128x128xi32>
    %13 = arith.cmpi slt, %11, %12 : vector<128x128xi32>
    %cst_12 = arith.constant 0x7F800000 : f32
    %14 = vector.broadcast %cst_12 : f32 to vector<128x128xf32>
    %15 = arith.select %13, %9, %14 : vector<128x128xi1>, vector<128x128xf32>
    %cst_13 = arith.constant dense<0x7F800000> : vector<128xf32>
    %16 = vector.multi_reduction <minimumf>, %15, %cst_13 [1] : vector<128x128xf32> to vector<128xf32>
    %17 = vector.shape_cast %16 : vector<128xf32> to vector<128x1xf32>
    %18 = vector.broadcast %17 : vector<128x1xf32> to vector<128x128xf32>
    %19 = arith.subf %18, %15 : vector<128x128xf32>
    %20 = math.exp %19 : vector<128x128xf32>
    %cst_14 = arith.constant 0.000000e+00 : f32
    %21 = vector.broadcast %cst_14 : f32 to vector<128x128xf32>
    %22 = arith.select %13, %20, %21 : vector<128x128xi1>, vector<128x128xf32>
    %cst_15 = arith.constant dense<0.000000e+00> : vector<128xf32>
    %23 = vector.multi_reduction <add>, %22, %cst_15 [1] : vector<128x128xf32> to vector<128xf32>
    %24 = vector.shape_cast %23 : vector<128xf32> to vector<128x1xf32>
    %25 = tpu.reciprocal %24 : vector<128x1xf32> -> vector<128x1xf32>
    %26 = vector.broadcast %25 : vector<128x1xf32> to vector<128x128xf32>
    %27 = arith.mulf %22, %26 : vector<128x128xf32>
    %28 = vector.broadcast %10 : f32 to vector<128x128xf32>
    %29 = arith.mulf %28, %27 : vector<128x128xf32>
    %30 = arith.truncf %29 : vector<128x128xf32> to vector<128x128xbf16>
    %c0_16 = arith.constant 0 : index
    %c0_17 = arith.constant 0 : index
    %31 = vector.load %arg5[%c0_16, %c0_17] : memref<128x128xbf16, #tpu.memory_space<vmem>>, vector<128x128xbf16>
    tpu.vector_store %arg5[%c0_16, %c0_17], %30 {strides = array<i32>} : memref<128x128xbf16, #tpu.memory_space<vmem>>, vector<128x128xbf16>,
    %c0_18 = arith.constant 0 : index
    %c0_19 = arith.constant 0 : index
    %c0_20 = arith.constant 0 : index
    %32 = vector.load %arg2[%c0_18, %c0_19, %c0_20] : memref<1x128x256xf32, #tpu.memory_space<vmem>>, vector<1x128x256xf32>
    %33 = vector.shape_cast %32 : vector<1x128x256xf32> to vector<128x256xf32>
    %c0_21 = arith.constant 0 : index
    %c0_22 = arith.constant 0 : index
    %34 = vector.load %arg5[%c0_21, %c0_22] : memref<128x128xbf16, #tpu.memory_space<vmem>>, vector<128x128xbf16>
    %35 = arith.truncf %33 : vector<128x256xf32> to vector<128x256xbf16>
    %cst_23 = arith.constant dense<0.000000e+00> : vector<128x256xf32>
    %36 = tpu.matmul %34, %35, %cst_23 {dimension_numbers = #tpu.dot_dimension_numbers<[1], [0], [0], [1], [0, 0, 1, 1], [], []>} : vector<128x128xbf16>, vector<128x256xbf16>, vector<128x256xf32> -> vector<128x256xf32>
    %37 = arith.addf %36, %33 : vector<128x256xf32>
    %c0_24 = arith.constant 0 : index
    %c0_25 = arith.constant 0 : index
    %c0_26 = arith.constant 0 : index
    %38 = vector.load %arg3[%c0_24, %c0_25, %c0_26] : memref<1x128x256xf32, #tpu.memory_space<vmem>>, vector<1x128x256xf32>
    %39 = vector.shape_cast %38 : vector<1x128x256xf32> to vector<128x256xf32>
    %40 = vector.shape_cast %37 : vector<128x256xf32> to vector<1x128x256xf32>
    tpu.vector_store %arg3[%c0_24, %c0_25, %c0_26], %40 {strides = array<i32>} : memref<1x128x256xf32, #tpu.memory_space<vmem>>, vector<1x128x256xf32>,
    return
  }
  func.func @transform_0(%arg0: i32) -> i32 {
    %c0_i32 = arith.constant 0 : i32
    %c0_i32_0 = arith.constant 0 : i32
    return %c0_i32 : i32
  }
  func.func @transform_1(%arg0: i32) -> (i32, i32, i32) {
    %c0_i32 = arith.constant 0 : i32
    %c0_i32_0 = arith.constant 0 : i32
    %c0_i32_1 = arith.constant 0 : i32
    return %arg0, %c0_i32, %c0_i32_0 : i32, i32, i32
  }
  func.func @transform_2(%arg0: i32) -> (i32, i32, i32) {
    %c0_i32 = arith.constant 0 : i32
    %c0_i32_0 = arith.constant 0 : i32
    %c0_i32_1 = arith.constant 0 : i32
    return %arg0, %c0_i32, %c0_i32_0 : i32, i32, i32
  }
}

</mosaic_0001>

<llo_original>
// kernel: tpu_custom_call.1
$region0: #{tpu_custom_call.1}
  #allocation0 [shape = 'u32[]', space=smem, size = 0x4, offset = 0x4, fixed_abs, tag = 'smem constant byte address 0x4 - core index']
  #allocation1 [shape = 'u32[72,128]{1,0:T(1,128)}', space=vmem, size = 0x9000, scoped, tag = 'internal scratch']
  #allocation2 [shape = 'f32[128,128]{1,0:T(8,128)}', space=vmem, size = 0x10000, scoped, tag = 'scratch operand']
  #allocation3 [shape = 'bf16[128,128]{1,0:T(8,128)(2,1)}', space=vmem, size = 0x8000, scoped, tag = 'scratch operand']
  #allocation4 [shape = 'f32[1]{0:T(128)S(6)}', space=smem, size = 0x200, scoped, tag = 'scoped memory for tpu_custom_call.1']
  %s0 = inlined_call_operand.<no memory space> [shape: f32[1], index: 0, kind: input, shape index: {}]
  %s1 = inlined_call_operand.hbm [shape: f32[2,128,256], index: 1, kind: input, shape index: {}]
  %s2 = inlined_call_operand.hbm [shape: f32[2,128,256], index: 2, kind: output, shape index: {}]
  %s3 = sld [smem:[#allocation0]]
  $region45: #{tpu_custom_call.1} parent=0
    _
  %s5 = ssub.s32 1, %s3
  %s6 = scalar_select 0, %s5, %s3
  %7 = sst [smem:[#allocation4]] %s0
  $region1: #{tpu_custom_call.1} parent=0
    #allocation5 [shape = 'u8[262144]{0}', space=vmem, size = 0x40000, scoped, tag = 'input window, operand 1']
    #allocation6 [shape = 's32[2]{0}', space=sflag, size = 0x8, scoped, tag = 'scoped memory for tpu_custom_call.1']
    #allocation7 [shape = 's32[2]{0}', space=sflag, size = 0x8, scoped, tag = 'scoped memory for tpu_custom_call.1']
    #allocation8 [shape = 'u8[262144]{0}', space=vmem, size = 0x40000, scoped, tag = 'output window, operand 0']
    %8 = vsyncpa [#allocation6], 0
    %s9 = scalar_lea.sflag [#allocation6], 1
    %10 = vsyncpa %s9, 0
    %11 = vsyncpa [#allocation7], 0
    %s12 = scalar_lea.sflag [#allocation7], 1
    %13 = vsyncpa %s12, 0
    loop: start=0, step=1, limit=4
    $region2: #{tpu_custom_call.1} parent=1 // loop_pre_header
      _
    $region3: #{tpu_custom_call.1} parent=1 // loop_header
      %s15 = sphi 0, %s19
      %p16 = scmp.ge.s32.totalorder %s15, 4
      %s23 = sphi 0, %s23
      %s25 = sphi 0, %s23
      %s26 = sphi 0, %s25
      %s40 = sphi 0, %s26
      %s46 = sphi 0, %s48
      %s49 = sphi 0, %s46
      %s50 = sphi 0, %s49
      %s66 = sphi 0, %s50
      %s72 = sphi 0, %s74
      %s75 = sphi 0, %s72
      %s76 = sphi 0, %s75
      %s92 = sphi 0, %s76
    $region4: #{tpu_custom_call.1} parent=1 // loop_header_branch
      %18 = sbr.rel (%p16) target = $region8
    $region5: #{tpu_custom_call.1} parent=1 // loop_body
      %s20 = ssub.s32 %s15, 1
      %s21 = ssub.s32 %s15, 2
      %s22 = sadd.s32 %s15, 1
      %s24 = sadd.s32 %s23, 1
      %p27 = scmp.eq.s32.totalorder %s15, 1
      %p28 = scmp.ne.s32.totalorder %s23, %s25
      %p29 = scmp.eq.s32.totalorder %s15, 0
      %p30 = por %p28, %p29
      %p31 = scmp.ne.s32.totalorder %s23, %s25
      %p32 = scmp.eq.s32.totalorder %s20, 1
      %p33 = por %p31, %p32
      %p34 = scmp.ne.s32.totalorder %s25, %s26
      %p35 = scmp.eq.s32.totalorder %s20, 0
      %p36 = por %p34, %p35
      %p37 = scmp.ne.s32.totalorder %s25, %s26
      %p38 = scmp.eq.s32.totalorder %s21, 1
      %p39 = por %p37, %p38
      %p41 = scmp.ne.s32.totalorder %s26, %s40
      %p42 = scmp.eq.s32.totalorder %s21, 0
      %p43 = por %p41, %p42
      %s44 = ssub.s32 %s15, %s22
      %p45 = scmp.eq.s32.totalorder %s44, 0
      %s47 = sadd.s32 %s46, 1
      %s48 = scalar_select %p45, %s46, %s47
      %p51 = pneg %p45
      %p52 = scmp.eq.s32.totalorder %s15, 1
      %p53 = por %p51, %p52
      %p54 = scmp.ne.s32.totalorder %s46, %s49
      %p55 = scmp.eq.s32.totalorder %s15, 0
      %p56 = por %p54, %p55
      %p57 = scmp.ne.s32.totalorder %s46, %s49
      %p58 = scmp.eq.s32.totalorder %s20, 1
      %p59 = por %p57, %p58
      %p60 = scmp.ne.s32.totalorder %s49, %s50
      %p61 = scmp.eq.s32.totalorder %s20, 0
      %p62 = por %p60, %p61
      %p63 = scmp.ne.s32.totalorder %s49, %s50
      %p64 = scmp.eq.s32.totalorder %s21, 1
      %p65 = por %p63, %p64
      %p67 = scmp.ne.s32.totalorder %s50, %s66
      %p68 = scmp.eq.s32.totalorder %s21, 0
      %p69 = por %p67, %p68
      %s70 = ssub.s32 %s15, %s22
      %p71 = scmp.eq.s32.totalorder %s70, 0
      %s73 = sadd.s32 %s72, 1
      %s74 = scalar_select %p71, %s72, %s73
      %p77 = pneg %p71
      %p78 = scmp.eq.s32.totalorder %s15, 1
      %p79 = por %p77, %p78
      %p80 = scmp.ne.s32.totalorder %s72, %s75
      %p81 = scmp.eq.s32.totalorder %s15, 0
      %p82 = por %p80, %p81
      %p83 = scmp.ne.s32.totalorder %s72, %s75
      %p84 = scmp.eq.s32.totalorder %s20, 1
      %p85 = por %p83, %p84
      %p86 = scmp.ne.s32.totalorder %s75, %s76
      %p87 = scmp.eq.s32.totalorder %s20, 0
      %p88 = por %p86, %p87
      %p89 = scmp.ne.s32.totalorder %s75, %s76
      %p90 = scmp.eq.s32.totalorder %s21, 1
      %p91 = por %p89, %p90
      %p93 = scmp.ne.s32.totalorder %s76, %s92
      %p94 = scmp.eq.s32.totalorder %s21, 0
      %p95 = por %p93, %p94
      %p96 = scmp.le.s32.totalorder 1, %s15
      %p97 = scmp.lt.s32.totalorder %s15, 3
      %p98 = pnand %p96, %p97
      %p99 = pneg %p98
      // Predicated region
      $region9: #{tpu_custom_call.1} parent=5 // pred_check
        _
      $region10: #{tpu_custom_call.1} parent=5 // pred_check_branch
        %101 = sbr.rel (%p98) target = $region12
      $region11: #{tpu_custom_call.1} parent=5 // pred_region
        %s102 = ssub.s32 %s15, 1
        // Predicated region
        $region13: #{tpu_custom_call.1} parent=11 // pred_check
          %p103 = pneg %p36
        $region14: #{tpu_custom_call.1} parent=11 // pred_check_branch
          %105 = sbr.rel (%p103) target = $region16
        $region15: #{tpu_custom_call.1} parent=11 // pred_region
          _
        $region16: #{tpu_custom_call.1} parent=11 // pred_fallthru
          _
      $region12: #{tpu_custom_call.1} parent=5 // pred_fallthru
        _
      %p106 = scmp.lt.s32.totalorder %s15, 2
      // Predicated region
      $region17: #{tpu_custom_call.1} parent=5 // pred_check
        %p107 = pneg %p106
      $region18: #{tpu_custom_call.1} parent=5 // pred_check_branch
        %109 = sbr.rel (%p107) target = $region20
      $region19: #{tpu_custom_call.1} parent=5 // pred_region
        // Predicated region
        $region21: #{tpu_custom_call.1} parent=19 // pred_check
          %p110 = pneg %p56
        $region22: #{tpu_custom_call.1} parent=19 // pred_check_branch
          %112 = sbr.rel (%p110) target = $region24
        $region23: #{tpu_custom_call.1} parent=19 // pred_region
          %s113 = sand.u32 %s46, 1
          %s114 = scalar_lea.sflag [#allocation6], %s113
          %s115 = sand.u32 %s46, 1
          %s116 = smul.addr %s115, 256
          %s117 = scalar_lea.vmem [#allocation5], %s116
          %119 = vsyncadd %s114, 0
          %s120 = smul.addr %s15, 32
          %s121 = smul.addr %s120, 8
          %s122 = scalar_lea.hbm %s1, %s121
          %s123 = sshll.u32 %s122, 4
          %s124 = int_to_ptr.hbm [resolvable:$true] %s123
          %s125 = sshll.u32 %s117, 4
          %s126 = int_to_ptr.vmem [resolvable:$true] %s125
          %131 = dma.hbm_to_vmem [thread:$0]  %s124, 4096, %s126, %s114, 256, 256, 16
        $region24: #{tpu_custom_call.1} parent=19 // pred_fallthru
          _
      $region20: #{tpu_custom_call.1} parent=5 // pred_fallthru
        _
      %p132 = scmp.le.s32.totalorder 1, %s15
      %p133 = scmp.lt.s32.totalorder %s15, 3
      %p134 = pnand %p132, %p133
      %p135 = pneg %p134
      // Predicated region
      $region25: #{tpu_custom_call.1} parent=5 // pred_check
        _
      $region26: #{tpu_custom_call.1} parent=5 // pred_check_branch
        %137 = sbr.rel (%p134) target = $region28
      $region27: #{tpu_custom_call.1} parent=5 // pred_region
        %s138 = ssub.s32 %s15, 1
        %s139 = sand.u32 %s49, 1
        %s140 = scalar_lea.sflag [#allocation6], %s139
        %s141 = sand.u32 %s49, 1
        %s142 = smul.addr %s141, 256
        %s143 = scalar_lea.vmem [#allocation5], %s142
        // Predicated region
        $region29: #{tpu_custom_call.1} parent=27 // pred_check
          %p144 = pneg %p62
        $region30: #{tpu_custom_call.1} parent=27 // pred_check_branch
          %146 = sbr.rel (%p144) target = $region32
        $region31: #{tpu_custom_call.1} parent=27 // pred_region
          %148 = dma.done %s140, 4096
        $region32: #{tpu_custom_call.1} parent=27 // pred_fallthru
          _
        %p149 = pneg %p36
        %p150 = pneg %p33
        %s151 = sand.u32 %s49, 1
        %s152 = scalar_lea.sflag [#allocation6], %s151
        %s153 = sand.u32 %s49, 1
        %s154 = smul.addr %s153, 256
        %s155 = scalar_lea.vmem [#allocation5], %s154
        %p156 = pneg %p62
        %p157 = pneg %p59
        %p158 = pneg %p88
        %p159 = pneg %p85
        %s160 = sand.u32 %s75, 1
        %s161 = scalar_lea.sflag [#allocation7], %s160
        %s162 = sand.u32 %s75, 1
        %s163 = smul.addr %s162, 256
        %s164 = scalar_lea.vmem [#allocation8], %s163
        %165 = vst [vmem:[#allocation2] sm:$0xff] 0.0
        %166 = vst [vmem:[#allocation2 + $0x8] sm:$0xff] 0.0
        %167 = vst [vmem:[#allocation2 + $0x10] sm:$0xff] 0.0
        %168 = vst [vmem:[#allocation2 + $0x18] sm:$0xff] 0.0
        %169 = vst [vmem:[#allocation2 + $0x20] sm:$0xff] 0.0
        %170 = vst [vmem:[#allocation2 + $0x28] sm:$0xff] 0.0
        %171 = vst [vmem:[#allocation2 + $0x30] sm:$0xff] 0.0
        %172 = vst [vmem:[#allocation2 + $0x38] sm:$0xff] 0.0
        %173 = vst [vmem:[#allocation2 + $0x40] sm:$0xff] 0.0
        %174 = vst [vmem:[#allocation2 + $0x48] sm:$0xff] 0.0
        %175 = vst [vmem:[#allocation2 + $0x50] sm:$0xff] 0.0
        %176 = vst [vmem:[#allocation2 + $0x58] sm:$0xff] 0.0
        %177 = vst [vmem:[#allocation2 + $0x60] sm:$0xff] 0.0
        %178 = vst [vmem:[#allocation2 + $0x68] sm:$0xff] 0.0
        %179 = vst [vmem:[#allocation2 + $0x70] sm:$0xff] 0.0
        %180 = vst [vmem:[#allocation2 + $0x78] sm:$0xff] 0.0
        %v181 = vld [vmem:[%s143] sm:$0xff]
        %v182 = vld [vmem:[%s143 + $0x8] sm:$0xff]
        %v183 = vld [vmem:[%s143 + $0x10] sm:$0xff]
        %v184 = vld [vmem:[%s143 + $0x18] sm:$0xff]
        %v185 = vld [vmem:[%s143 + $0x20] sm:$0xff]
        %v186 = vld [vmem:[%s143 + $0x28] sm:$0xff]
        %v187 = vld [vmem:[%s143 + $0x30] sm:$0xff]
        %v188 = vld [vmem:[%s143 + $0x38] sm:$0xff]
        %v189 = vld [vmem:[%s143 + $0x40] sm:$0xff]
        %v190 = vld [vmem:[%s143 + $0x48] sm:$0xff]
        %v191 = vld [vmem:[%s143 + $0x50] sm:$0xff]
        %v192 = vld [vmem:[%s143 + $0x58] sm:$0xff]
        %v193 = vld [vmem:[%s143 + $0x60] sm:$0xff]
        %v194 = vld [vmem:[%s143 + $0x68] sm:$0xff]
        %v195 = vld [vmem:[%s143 + $0x70] sm:$0xff]
        %v196 = vld [vmem:[%s143 + $0x78] sm:$0xff]
        %v197 = vld [vmem:[%s143 + $0x80] sm:$0xff]
        %v198 = vld [vmem:[%s143 + $0x88] sm:$0xff]
        %v199 = vld [vmem:[%s143 + $0x90] sm:$0xff]
        %v200 = vld [vmem:[%s143 + $0x98] sm:$0xff]
        %v201 = vld [vmem:[%s143 + $0xa0] sm:$0xff]
        %v202 = vld [vmem:[%s143 + $0xa8] sm:$0xff]
        %v203 = vld [vmem:[%s143 + $0xb0] sm:$0xff]
        %v204 = vld [vmem:[%s143 + $0xb8] sm:$0xff]
        %v205 = vld [vmem:[%s143 + $0xc0] sm:$0xff]
        %v206 = vld [vmem:[%s143 + $0xc8] sm:$0xff]
        %v207 = vld [vmem:[%s143 + $0xd0] sm:$0xff]
        %v208 = vld [vmem:[%s143 + $0xd8] sm:$0xff]
        %v209 = vld [vmem:[%s143 + $0xe0] sm:$0xff]
        %v210 = vld [vmem:[%s143 + $0xe8] sm:$0xff]
        %v211 = vld [vmem:[%s143 + $0xf0] sm:$0xff]
        %v212 = vld [vmem:[%s143 + $0xf8] sm:$0xff]
        %v213 = vpack.c.bf16 %v183, %v181
        %v214 = vpack.c.bf16 %v184, %v182
        %v215 = vpack.c.bf16 %v187, %v185
        %v216 = vpack.c.bf16 %v188, %v186
        %v217 = vpack.c.bf16 %v191, %v189
        %v218 = vpack.c.bf16 %v192, %v190
        %v219 = vpack.c.bf16 %v195, %v193
        %v220 = vpack.c.bf16 %v196, %v194
        %v221 = vpack.c.bf16 %v199, %v197
        %v222 = vpack.c.bf16 %v200, %v198
        %v223 = vpack.c.bf16 %v203, %v201
        %v224 = vpack.c.bf16 %v204, %v202
        %v225 = vpack.c.bf16 %v207, %v205
        %v226 = vpack.c.bf16 %v208, %v206
        %v227 = vpack.c.bf16 %v211, %v209
        %v228 = vpack.c.bf16 %v212, %v210
        %v229 = vld [vmem:[#allocation2] sm:$0xff]
        %v230 = vld [vmem:[#allocation2 + $0x8] sm:$0xff]
        %v231 = vld [vmem:[#allocation2 + $0x10] sm:$0xff]
        %v232 = vld [vmem:[#allocation2 + $0x18] sm:$0xff]
        %v233 = vld [vmem:[#allocation2 + $0x20] sm:$0xff]
        %v234 = vld [vmem:[#allocation2 + $0x28] sm:$0xff]
        %v235 = vld [vmem:[#allocation2 + $0x30] sm:$0xff]
        %v236 = vld [vmem:[#allocation2 + $0x38] sm:$0xff]
        %v237 = vld [vmem:[#allocation2 + $0x40] sm:$0xff]
        %v238 = vld [vmem:[#allocation2 + $0x48] sm:$0xff]
        %v239 = vld [vmem:[#allocation2 + $0x50] sm:$0xff]
        %v240 = vld [vmem:[#allocation2 + $0x58] sm:$0xff]
        %v241 = vld [vmem:[#allocation2 + $0x60] sm:$0xff]
        %v242 = vld [vmem:[#allocation2 + $0x68] sm:$0xff]
        %v243 = vld [vmem:[#allocation2 + $0x70] sm:$0xff]
        %v244 = vld [vmem:[#allocation2 + $0x78] sm:$0xff]
        %245 = vmatpush.bf16.xpose.msra.mxu0 %v227
        %246 = vmatpush.bf16.xpose.msra.mxu0 %v225
        %247 = vmatpush.bf16.xpose.msra.mxu0 %v223
        %248 = vmatpush.bf16.xpose.msra.mxu0 %v221
        %249 = vmatpush.bf16.xpose.msra.mxu0 %v219
        %250 = vmatpush.bf16.xpose.msra.mxu0 %v217
        %251 = vmatpush.bf16.xpose.msra.mxu0 %v215
        %252 = vmatpush.bf16.xpose.msra.mxu0 %v213
        %253 = vmatmul.bf16.gmra.mxu0 %v213
        %v254 = vpop.f32.mrf.mxu0
        %v255 = vadd.f32 0.0, %v254
        %v256 = vpop.f32.mrf.mxu0
        %v257 = vadd.f32 0.0, %v256
        %258 = vmatmul.bf16.gmra.mxu0 %v215
        %v259 = vpop.f32.mrf.mxu0
        %v260 = vadd.f32 0.0, %v259
        %v261 = vpop.f32.mrf.mxu0
        %v262 = vadd.f32 0.0, %v261
        %263 = vmatmul.bf16.gmra.mxu0 %v217
        %v264 = vpop.f32.mrf.mxu0
        %v265 = vadd.f32 0.0, %v264
        %v266 = vpop.f32.mrf.mxu0
        %v267 = vadd.f32 0.0, %v266
        %268 = vmatmul.bf16.gmra.mxu0 %v219
        %v269 = vpop.f32.mrf.mxu0
        %v270 = vadd.f32 0.0, %v269
        %v271 = vpop.f32.mrf.mxu0
        %v272 = vadd.f32 0.0, %v271
        %273 = vmatmul.bf16.gmra.mxu0 %v221
        %v274 = vpop.f32.mrf.mxu0
        %v275 = vadd.f32 0.0, %v274
        %v276 = vpop.f32.mrf.mxu0
        %v277 = vadd.f32 0.0, %v276
        %278 = vmatmul.bf16.gmra.mxu0 %v223
        %v279 = vpop.f32.mrf.mxu0
        %v280 = vadd.f32 0.0, %v279
        %v281 = vpop.f32.mrf.mxu0
        %v282 = vadd.f32 0.0, %v281
        %283 = vmatmul.bf16.gmra.mxu0 %v225
        %v284 = vpop.f32.mrf.mxu0
        %v285 = vadd.f32 0.0, %v284
        %v286 = vpop.f32.mrf.mxu0
        %v287 = vadd.f32 0.0, %v286
        %288 = vmatmul.bf16.gmra.mxu0 %v227
        %v289 = vpop.f32.mrf.mxu0
        %v290 = vadd.f32 0.0, %v289
        %v291 = vpop.f32.mrf.mxu0
        %v292 = vadd.f32 0.0, %v291
        %293 = vdwg.mxu0
        %294 = vmatpush.bf16.xpose.msra.mxu0 %v228
        %295 = vmatpush.bf16.xpose.msra.mxu0 %v226
        %296 = vmatpush.bf16.xpose.msra.mxu0 %v224
        %297 = vmatpush.bf16.xpose.msra.mxu0 %v222
        %298 = vmatpush.bf16.xpose.msra.mxu0 %v220
        %299 = vmatpush.bf16.xpose.msra.mxu0 %v218
        %300 = vmatpush.bf16.xpose.msra.mxu0 %v216
        %301 = vmatpush.bf16.xpose.msra.mxu0 %v214
        %302 = vmatmul.bf16.gmra.mxu0 %v214
        %v303 = vpop.f32.mrf.mxu0
        %v304 = vadd.f32 %v255, %v303
        %v305 = vpop.f32.mrf.mxu0
        %v306 = vadd.f32 %v257, %v305
        %307 = vmatmul.bf16.gmra.mxu0 %v216
        %v308 = vpop.f32.mrf.mxu0
        %v309 = vadd.f32 %v260, %v308
        %v310 = vpop.f32.mrf.mxu0
        %v311 = vadd.f32 %v262, %v310
        %312 = vmatmul.bf16.gmra.mxu0 %v218
        %v313 = vpop.f32.mrf.mxu0
        %v314 = vadd.f32 %v265, %v313
        %v315 = vpop.f32.mrf.mxu0
        %v316 = vadd.f32 %v267, %v315
        %317 = vmatmul.bf16.gmra.mxu0 %v220
        %v318 = vpop.f32.mrf.mxu0
        %v319 = vadd.f32 %v270, %v318
        %v320 = vpop.f32.mrf.mxu0
        %v321 = vadd.f32 %v272, %v320
        %322 = vmatmul.bf16.gmra.mxu0 %v222
        %v323 = vpop.f32.mrf.mxu0
        %v324 = vadd.f32 %v275, %v323
        %v325 = vpop.f32.mrf.mxu0
        %v326 = vadd.f32 %v277, %v325
        %327 = vmatmul.bf16.gmra.mxu0 %v224
        %v328 = vpop.f32.mrf.mxu0
        %v329 = vadd.f32 %v280, %v328
        %v330 = vpop.f32.mrf.mxu0
        %v331 = vadd.f32 %v282, %v330
        %332 = vmatmul.bf16.gmra.mxu0 %v226
        %v333 = vpop.f32.mrf.mxu0
        %v334 = vadd.f32 %v285, %v333
        %v335 = vpop.f32.mrf.mxu0
        %v336 = vadd.f32 %v287, %v335
        %337 = vmatmul.bf16.gmra.mxu0 %v228
        %v338 = vpop.f32.mrf.mxu0
        %v339 = vadd.f32 %v290, %v338
        %v340 = vpop.f32.mrf.mxu0
        %v341 = vadd.f32 %v292, %v340
        %342 = vdwg.mxu0
        %v343 = vadd.f32 %v229, %v304
        %v344 = vadd.f32 %v230, %v306
        %v345 = vadd.f32 %v231, %v309
        %v346 = vadd.f32 %v232, %v311
        %v347 = vadd.f32 %v233, %v314
        %v348 = vadd.f32 %v234, %v316
        %v349 = vadd.f32 %v235, %v319
        %v350 = vadd.f32 %v236, %v321
        %v351 = vadd.f32 %v237, %v324
        %v352 = vadd.f32 %v238, %v326
        %v353 = vadd.f32 %v239, %v329
        %v354 = vadd.f32 %v240, %v331
        %v355 = vadd.f32 %v241, %v334
        %v356 = vadd.f32 %v242, %v336
        %v357 = vadd.f32 %v243, %v339
        %v358 = vadd.f32 %v244, %v341
        %359 = vst [vmem:[#allocation2] sm:$0xff] %v343
        %360 = vst [vmem:[#allocation2 + $0x8] sm:$0xff] %v344
        %361 = vst [vmem:[#allocation2 + $0x10] sm:$0xff] %v345
        %362 = vst [vmem:[#allocation2 + $0x18] sm:$0xff] %v346
        %363 = vst [vmem:[#allocation2 + $0x20] sm:$0xff] %v347
        %364 = vst [vmem:[#allocation2 + $0x28] sm:$0xff] %v348
        %365 = vst [vmem:[#allocation2 + $0x30] sm:$0xff] %v349
        %366 = vst [vmem:[#allocation2 + $0x38] sm:$0xff] %v350
        %367 = vst [vmem:[#allocation2 + $0x40] sm:$0xff] %v351
        %368 = vst [vmem:[#allocation2 + $0x48] sm:$0xff] %v352
        %369 = vst [vmem:[#allocation2 + $0x50] sm:$0xff] %v353
        %370 = vst [vmem:[#allocation2 + $0x58] sm:$0xff] %v354
        %371 = vst [vmem:[#allocation2 + $0x60] sm:$0xff] %v355
        %372 = vst [vmem:[#allocation2 + $0x68] sm:$0xff] %v356
        %373 = vst [vmem:[#allocation2 + $0x70] sm:$0xff] %v357
        %374 = vst [vmem:[#allocation2 + $0x78] sm:$0xff] %v358
        %v375 = vld [vmem:[#allocation2] sm:$0xff]
        %v376 = vld [vmem:[#allocation2 + $0x8] sm:$0xff]
        %v377 = vld [vmem:[#allocation2 + $0x10] sm:$0xff]
        %v378 = vld [vmem:[#allocation2 + $0x18] sm:$0xff]
        %v379 = vld [vmem:[#allocation2 + $0x20] sm:$0xff]
        %v380 = vld [vmem:[#allocation2 + $0x28] sm:$0xff]
        %v381 = vld [vmem:[#allocation2 + $0x30] sm:$0xff]
        %v382 = vld [vmem:[#allocation2 + $0x38] sm:$0xff]
        %v383 = vld [vmem:[#allocation2 + $0x40] sm:$0xff]
        %v384 = vld [vmem:[#allocation2 + $0x48] sm:$0xff]
        %v385 = vld [vmem:[#allocation2 + $0x50] sm:$0xff]
        %v386 = vld [vmem:[#allocation2 + $0x58] sm:$0xff]
        %v387 = vld [vmem:[#allocation2 + $0x60] sm:$0xff]
        %v388 = vld [vmem:[#allocation2 + $0x68] sm:$0xff]
        %v389 = vld [vmem:[#allocation2 + $0x70] sm:$0xff]
        %v390 = vld [vmem:[#allocation2 + $0x78] sm:$0xff]
        %s391 = sld [smem:[#allocation4]]
        %v392 = vlaneseq
        %v393 = vand.u32 %v392, 127
        %vm394 = vcmp.lt.s32.totalorder %v393, 4
        %v395 = vsel %vm394, %v375, inf
        %v396 = vsel %vm394, %v376, inf
        %v397 = vsel %vm394, %v377, inf
        %v398 = vsel %vm394, %v378, inf
        %v399 = vsel %vm394, %v379, inf
        %v400 = vsel %vm394, %v380, inf
        %v401 = vsel %vm394, %v381, inf
        %v402 = vsel %vm394, %v382, inf
        %v403 = vsel %vm394, %v383, inf
        %v404 = vsel %vm394, %v384, inf
        %v405 = vsel %vm394, %v385, inf
        %v406 = vsel %vm394, %v386, inf
        %v407 = vsel %vm394, %v387, inf
        %v408 = vsel %vm394, %v388, inf
        %v409 = vsel %vm394, %v389, inf
        %v410 = vsel %vm394, %v390, inf
        %411 = vmin.xlane.f32.xlu0 %v395
        %v412 = vpop.xlane.xlu0 %411
        %413 = vmin.xlane.f32.xlu0 %v396
        %v414 = vpop.xlane.xlu0 %413
        %415 = vmin.xlane.f32.xlu0 %v397
        %v416 = vpop.xlane.xlu0 %415
        %417 = vmin.xlane.f32.xlu0 %v398
        %v418 = vpop.xlane.xlu0 %417
        %419 = vmin.xlane.f32.xlu0 %v399
        %v420 = vpop.xlane.xlu0 %419
        %421 = vmin.xlane.f32.xlu0 %v400
        %v422 = vpop.xlane.xlu0 %421
        %423 = vmin.xlane.f32.xlu0 %v401
        %v424 = vpop.xlane.xlu0 %423
        %425 = vmin.xlane.f32.xlu0 %v402
        %v426 = vpop.xlane.xlu0 %425
        %427 = vmin.xlane.f32.xlu0 %v403
        %v428 = vpop.xlane.xlu0 %427
        %429 = vmin.xlane.f32.xlu0 %v404
        %v430 = vpop.xlane.xlu0 %429
        %431 = vmin.xlane.f32.xlu0 %v405
        %v432 = vpop.xlane.xlu0 %431
        %433 = vmin.xlane.f32.xlu0 %v406
        %v434 = vpop.xlane.xlu0 %433
        %435 = vmin.xlane.f32.xlu0 %v407
        %v436 = vpop.xlane.xlu0 %435
        %437 = vmin.xlane.f32.xlu0 %v408
        %v438 = vpop.xlane.xlu0 %437
        %439 = vmin.xlane.f32.xlu0 %v409
        %v440 = vpop.xlane.xlu0 %439
        %441 = vmin.xlane.f32.xlu0 %v410
        %v442 = vpop.xlane.xlu0 %441
        %v443 = vsub.f32 %v412, %v395
        %v444 = vsub.f32 %v414, %v396
        %v445 = vsub.f32 %v416, %v397
        %v446 = vsub.f32 %v418, %v398
        %v447 = vsub.f32 %v420, %v399
        %v448 = vsub.f32 %v422, %v400
        %v449 = vsub.f32 %v424, %v401
        %v450 = vsub.f32 %v426, %v402
        %v451 = vsub.f32 %v428, %v403
        %v452 = vsub.f32 %v430, %v404
        %v453 = vsub.f32 %v432, %v405
        %v454 = vsub.f32 %v434, %v406
        %v455 = vsub.f32 %v436, %v407
        %v456 = vsub.f32 %v438, %v408
        %v457 = vsub.f32 %v440, %v409
        %v458 = vsub.f32 %v442, %v410
        %v459 = vmul.f32 %v443, 1.442695
        %v460 = vpow.pop %v459
        %v461 = vmul.f32 %v444, 1.442695
        %v462 = vpow.pop %v461
        %v463 = vmul.f32 %v445, 1.442695
        %v464 = vpow.pop %v463
        %v465 = vmul.f32 %v446, 1.442695
        %v466 = vpow.pop %v465
        %v467 = vmul.f32 %v447, 1.442695
        %v468 = vpow.pop %v467
        %v469 = vmul.f32 %v448, 1.442695
        %v470 = vpow.pop %v469
        %v471 = vmul.f32 %v449, 1.442695
        %v472 = vpow.pop %v471
        %v473 = vmul.f32 %v450, 1.442695
        %v474 = vpow.pop %v473
        %v475 = vmul.f32 %v451, 1.442695
        %v476 = vpow.pop %v475
        %v477 = vmul.f32 %v452, 1.442695
        %v478 = vpow.pop %v477
        %v479 = vmul.f32 %v453, 1.442695
        %v480 = vpow.pop %v479
        %v481 = vmul.f32 %v454, 1.442695
        %v482 = vpow.pop %v481
        %v483 = vmul.f32 %v455, 1.442695
        %v484 = vpow.pop %v483
        %v485 = vmul.f32 %v456, 1.442695
        %v486 = vpow.pop %v485
        %v487 = vmul.f32 %v457, 1.442695
        %v488 = vpow.pop %v487
        %v489 = vmul.f32 %v458, 1.442695
        %v490 = vpow.pop %v489
        %v491 = vsel %vm394, %v460, 0.0
        %v492 = vsel %vm394, %v462, 0.0
        %v493 = vsel %vm394, %v464, 0.0
        %v494 = vsel %vm394, %v466, 0.0
        %v495 = vsel %vm394, %v468, 0.0
        %v496 = vsel %vm394, %v470, 0.0
        %v497 = vsel %vm394, %v472, 0.0
        %v498 = vsel %vm394, %v474, 0.0
        %v499 = vsel %vm394, %v476, 0.0
        %v500 = vsel %vm394, %v478, 0.0
        %v501 = vsel %vm394, %v480, 0.0
        %v502 = vsel %vm394, %v482, 0.0
        %v503 = vsel %vm394, %v484, 0.0
        %v504 = vsel %vm394, %v486, 0.0
        %v505 = vsel %vm394, %v488, 0.0
        %v506 = vsel %vm394, %v490, 0.0
        %507 = vadd.xlane.f32.xlu0 %v491
        %v508 = vpop.xlane.xlu0 %507
        %509 = vadd.xlane.f32.xlu0 %v492
        %v510 = vpop.xlane.xlu0 %509
        %511 = vadd.xlane.f32.xlu0 %v493
        %v512 = vpop.xlane.xlu0 %511
        %513 = vadd.xlane.f32.xlu0 %v494
        %v514 = vpop.xlane.xlu0 %513
        %515 = vadd.xlane.f32.xlu0 %v495
        %v516 = vpop.xlane.xlu0 %515
        %517 = vadd.xlane.f32.xlu0 %v496
        %v518 = vpop.xlane.xlu0 %517
        %519 = vadd.xlane.f32.xlu0 %v497
        %v520 = vpop.xlane.xlu0 %519
        %521 = vadd.xlane.f32.xlu0 %v498
        %v522 = vpop.xlane.xlu0 %521
        %523 = vadd.xlane.f32.xlu0 %v499
        %v524 = vpop.xlane.xlu0 %523
        %525 = vadd.xlane.f32.xlu0 %v500
        %v526 = vpop.xlane.xlu0 %525
        %527 = vadd.xlane.f32.xlu0 %v501
        %v528 = vpop.xlane.xlu0 %527
        %529 = vadd.xlane.f32.xlu0 %v502
        %v530 = vpop.xlane.xlu0 %529
        %531 = vadd.xlane.f32.xlu0 %v503
        %v532 = vpop.xlane.xlu0 %531
        %533 = vadd.xlane.f32.xlu0 %v504
        %v534 = vpop.xlane.xlu0 %533
        %535 = vadd.xlane.f32.xlu0 %v505
        %v536 = vpop.xlane.xlu0 %535
        %537 = vadd.xlane.f32.xlu0 %v506
        %v538 = vpop.xlane.xlu0 %537
        %v539 = vrcp.pop %v508
        %v540 = vmul.f32 %v508, %v539
        %v541 = vsub.f32 1.0, %v540
        %v542 = vmul.f32 %v539, %v541
        %v543 = vadd.f32 %v539, %v542
        %vm544 = vweird.f32 %v508
        %vm545 = vweird.f32 %v539
        %vm546 = vmor %vm544, %vm545
        %v547 = vsel %vm546, %v539, %v543
        %v548 = vand.u32 2147483647, %v508
        %vm549 = vcmp.eq.f32.partialorder %v548, 8.507059e+37
        %v550 = vand.u32 %v508, 2147483648
        %v551 = vor.u32 1.1754944e-38, %v550
        %v552 = vsel %vm549, %v551, %v547
        %v553 = vrcp.pop %v510
        %v554 = vmul.f32 %v510, %v553
        %v555 = vsub.f32 1.0, %v554
        %v556 = vmul.f32 %v553, %v555
        %v557 = vadd.f32 %v553, %v556
        %vm558 = vweird.f32 %v510
        %vm559 = vweird.f32 %v553
        %vm560 = vmor %vm558, %vm559
        %v561 = vsel %vm560, %v553, %v557
        %v562 = vand.u32 2147483647, %v510
        %vm563 = vcmp.eq.f32.partialorder %v562, 8.507059e+37
        %v564 = vand.u32 %v510, 2147483648
        %v565 = vor.u32 1.1754944e-38, %v564
        %v566 = vsel %vm563, %v565, %v561
        %v567 = vrcp.pop %v512
        %v568 = vmul.f32 %v512, %v567
        %v569 = vsub.f32 1.0, %v568
        %v570 = vmul.f32 %v567, %v569
        %v571 = vadd.f32 %v567, %v570
        %vm572 = vweird.f32 %v512
        %vm573 = vweird.f32 %v567
        %vm574 = vmor %vm572, %vm573
        %v575 = vsel %vm574, %v567, %v571
        %v576 = vand.u32 2147483647, %v512
        %vm577 = vcmp.eq.f32.partialorder %v576, 8.507059e+37
        %v578 = vand.u32 %v512, 2147483648
        %v579 = vor.u32 1.1754944e-38, %v578
        %v580 = vsel %vm577, %v579, %v575
        %v581 = vrcp.pop %v514
        %v582 = vmul.f32 %v514, %v581
        %v583 = vsub.f32 1.0, %v582
        %v584 = vmul.f32 %v581, %v583
        %v585 = vadd.f32 %v581, %v584
        %vm586 = vweird.f32 %v514
        %vm587 = vweird.f32 %v581
        %vm588 = vmor %vm586, %vm587
        %v589 = vsel %vm588, %v581, %v585
        %v590 = vand.u32 2147483647, %v514
        %vm591 = vcmp.eq.f32.partialorder %v590, 8.507059e+37
        %v592 = vand.u32 %v514, 2147483648
        %v593 = vor.u32 1.1754944e-38, %v592
        %v594 = vsel %vm591, %v593, %v589
        %v595 = vrcp.pop %v516
        %v596 = vmul.f32 %v516, %v595
        %v597 = vsub.f32 1.0, %v596
        %v598 = vmul.f32 %v595, %v597
        %v599 = vadd.f32 %v595, %v598
        %vm600 = vweird.f32 %v516
        %vm601 = vweird.f32 %v595
        %vm602 = vmor %vm600, %vm601
        %v603 = vsel %vm602, %v595, %v599
        %v604 = vand.u32 2147483647, %v516
        %vm605 = vcmp.eq.f32.partialorder %v604, 8.507059e+37
        %v606 = vand.u32 %v516, 2147483648
        %v607 = vor.u32 1.1754944e-38, %v606
        %v608 = vsel %vm605, %v607, %v603
        %v609 = vrcp.pop %v518
        %v610 = vmul.f32 %v518, %v609
        %v611 = vsub.f32 1.0, %v610
        %v612 = vmul.f32 %v609, %v611
        %v613 = vadd.f32 %v609, %v612
        %vm614 = vweird.f32 %v518
        %vm615 = vweird.f32 %v609
        %vm616 = vmor %vm614, %vm615
        %v617 = vsel %vm616, %v609, %v613
        %v618 = vand.u32 2147483647, %v518
        %vm619 = vcmp.eq.f32.partialorder %v618, 8.507059e+37
        %v620 = vand.u32 %v518, 2147483648
        %v621 = vor.u32 1.1754944e-38, %v620
        %v622 = vsel %vm619, %v621, %v617
        %v623 = vrcp.pop %v520
        %v624 = vmul.f32 %v520, %v623
        %v625 = vsub.f32 1.0, %v624
        %v626 = vmul.f32 %v623, %v625
        %v627 = vadd.f32 %v623, %v626
        %vm628 = vweird.f32 %v520
        %vm629 = vweird.f32 %v623
        %vm630 = vmor %vm628, %vm629
        %v631 = vsel %vm630, %v623, %v627
        %v632 = vand.u32 2147483647, %v520
        %vm633 = vcmp.eq.f32.partialorder %v632, 8.507059e+37
        %v634 = vand.u32 %v520, 2147483648
        %v635 = vor.u32 1.1754944e-38, %v634
        %v636 = vsel %vm633, %v635, %v631
        %v637 = vrcp.pop %v522
        %v638 = vmul.f32 %v522, %v637
        %v639 = vsub.f32 1.0, %v638
        %v640 = vmul.f32 %v637, %v639
        %v641 = vadd.f32 %v637, %v640
        %vm642 = vweird.f32 %v522
        %vm643 = vweird.f32 %v637
        %vm644 = vmor %vm642, %vm643
        %v645 = vsel %vm644, %v637, %v641
        %v646 = vand.u32 2147483647, %v522
        %vm647 = vcmp.eq.f32.partialorder %v646, 8.507059e+37
        %v648 = vand.u32 %v522, 2147483648
        %v649 = vor.u32 1.1754944e-38, %v648
        %v650 = vsel %vm647, %v649, %v645
        %v651 = vrcp.pop %v524
        %v652 = vmul.f32 %v524, %v651
        %v653 = vsub.f32 1.0, %v652
        %v654 = vmul.f32 %v651, %v653
        %v655 = vadd.f32 %v651, %v654
        %vm656 = vweird.f32 %v524
        %vm657 = vweird.f32 %v651
        %vm658 = vmor %vm656, %vm657
        %v659 = vsel %vm658, %v651, %v655
        %v660 = vand.u32 2147483647, %v524
        %vm661 = vcmp.eq.f32.partialorder %v660, 8.507059e+37
        %v662 = vand.u32 %v524, 2147483648
        %v663 = vor.u32 1.1754944e-38, %v662
        %v664 = vsel %vm661, %v663, %v659
        %v665 = vrcp.pop %v526
        %v666 = vmul.f32 %v526, %v665
        %v667 = vsub.f32 1.0, %v666
        %v668 = vmul.f32 %v665, %v667
        %v669 = vadd.f32 %v665, %v668
        %vm670 = vweird.f32 %v526
        %vm671 = vweird.f32 %v665
        %vm672 = vmor %vm670, %vm671
        %v673 = vsel %vm672, %v665, %v669
        %v674 = vand.u32 2147483647, %v526
        %vm675 = vcmp.eq.f32.partialorder %v674, 8.507059e+37
        %v676 = vand.u32 %v526, 2147483648
        %v677 = vor.u32 1.1754944e-38, %v676
        %v678 = vsel %vm675, %v677, %v673
        %v679 = vrcp.pop %v528
        %v680 = vmul.f32 %v528, %v679
        %v681 = vsub.f32 1.0, %v680
        %v682 = vmul.f32 %v679, %v681
        %v683 = vadd.f32 %v679, %v682
        %vm684 = vweird.f32 %v528
        %vm685 = vweird.f32 %v679
        %vm686 = vmor %vm684, %vm685
        %v687 = vsel %vm686, %v679, %v683
        %v688 = vand.u32 2147483647, %v528
        %vm689 = vcmp.eq.f32.partialorder %v688, 8.507059e+37
        %v690 = vand.u32 %v528, 2147483648
        %v691 = vor.u32 1.1754944e-38, %v690
        %v692 = vsel %vm689, %v691, %v687
        %v693 = vrcp.pop %v530
        %v694 = vmul.f32 %v530, %v693
        %v695 = vsub.f32 1.0, %v694
        %v696 = vmul.f32 %v693, %v695
        %v697 = vadd.f32 %v693, %v696
        %vm698 = vweird.f32 %v530
        %vm699 = vweird.f32 %v693
        %vm700 = vmor %vm698, %vm699
        %v701 = vsel %vm700, %v693, %v697
        %v702 = vand.u32 2147483647, %v530
        %vm703 = vcmp.eq.f32.partialorder %v702, 8.507059e+37
        %v704 = vand.u32 %v530, 2147483648
        %v705 = vor.u32 1.1754944e-38, %v704
        %v706 = vsel %vm703, %v705, %v701
        %v707 = vrcp.pop %v532
        %v708 = vmul.f32 %v532, %v707
        %v709 = vsub.f32 1.0, %v708
        %v710 = vmul.f32 %v707, %v709
        %v711 = vadd.f32 %v707, %v710
        %vm712 = vweird.f32 %v532
        %vm713 = vweird.f32 %v707
        %vm714 = vmor %vm712, %vm713
        %v715 = vsel %vm714, %v707, %v711
        %v716 = vand.u32 2147483647, %v532
        %vm717 = vcmp.eq.f32.partialorder %v716, 8.507059e+37
        %v718 = vand.u32 %v532, 2147483648
        %v719 = vor.u32 1.1754944e-38, %v718
        %v720 = vsel %vm717, %v719, %v715
        %v721 = vrcp.pop %v534
        %v722 = vmul.f32 %v534, %v721
        %v723 = vsub.f32 1.0, %v722
        %v724 = vmul.f32 %v721, %v723
        %v725 = vadd.f32 %v721, %v724
        %vm726 = vweird.f32 %v534
        %vm727 = vweird.f32 %v721
        %vm728 = vmor %vm726, %vm727
        %v729 = vsel %vm728, %v721, %v725
        %v730 = vand.u32 2147483647, %v534
        %vm731 = vcmp.eq.f32.partialorder %v730, 8.507059e+37
        %v732 = vand.u32 %v534, 2147483648
        %v733 = vor.u32 1.1754944e-38, %v732
        %v734 = vsel %vm731, %v733, %v729
        %v735 = vrcp.pop %v536
        %v736 = vmul.f32 %v536, %v735
        %v737 = vsub.f32 1.0, %v736
        %v738 = vmul.f32 %v735, %v737
        %v739 = vadd.f32 %v735, %v738
        %vm740 = vweird.f32 %v536
        %vm741 = vweird.f32 %v735
        %vm742 = vmor %vm740, %vm741
        %v743 = vsel %vm742, %v735, %v739
        %v744 = vand.u32 2147483647, %v536
        %vm745 = vcmp.eq.f32.partialorder %v744, 8.507059e+37
        %v746 = vand.u32 %v536, 2147483648
        %v747 = vor.u32 1.1754944e-38, %v746
        %v748 = vsel %vm745, %v747, %v743
        %v749 = vrcp.pop %v538
        %v750 = vmul.f32 %v538, %v749
        %v751 = vsub.f32 1.0, %v750
        %v752 = vmul.f32 %v749, %v751
        %v753 = vadd.f32 %v749, %v752
        %vm754 = vweird.f32 %v538
        %vm755 = vweird.f32 %v749
        %vm756 = vmor %vm754, %vm755
        %v757 = vsel %vm756, %v749, %v753
        %v758 = vand.u32 2147483647, %v538
        %vm759 = vcmp.eq.f32.partialorder %v758, 8.507059e+37
        %v760 = vand.u32 %v538, 2147483648
        %v761 = vor.u32 1.1754944e-38, %v760
        %v762 = vsel %vm759, %v761, %v757
        %v763 = vmul.f32 %v491, %v552
        %v764 = vmul.f32 %v492, %v566
        %v765 = vmul.f32 %v493, %v580
        %v766 = vmul.f32 %v494, %v594
        %v767 = vmul.f32 %v495, %v608
        %v768 = vmul.f32 %v496, %v622
        %v769 = vmul.f32 %v497, %v636
        %v770 = vmul.f32 %v498, %v650
        %v771 = vmul.f32 %v499, %v664
        %v772 = vmul.f32 %v500, %v678
        %v773 = vmul.f32 %v501, %v692
        %v774 = vmul.f32 %v502, %v706
        %v775 = vmul.f32 %v503, %v720
        %v776 = vmul.f32 %v504, %v734
        %v777 = vmul.f32 %v505, %v748
        %v778 = vmul.f32 %v506, %v762
        %v779 = vstv %s391
        %v780 = vmul.f32 %v779, %v763
        %v781 = vmul.f32 %v779, %v764
        %v782 = vmul.f32 %v779, %v765
        %v783 = vmul.f32 %v779, %v766
        %v784 = vmul.f32 %v779, %v767
        %v785 = vmul.f32 %v779, %v768
        %v786 = vmul.f32 %v779, %v769
        %v787 = vmul.f32 %v779, %v770
        %v788 = vmul.f32 %v779, %v771
        %v789 = vmul.f32 %v779, %v772
        %v790 = vmul.f32 %v779, %v773
        %v791 = vmul.f32 %v779, %v774
        %v792 = vmul.f32 %v779, %v775
        %v793 = vmul.f32 %v779, %v776
        %v794 = vmul.f32 %v779, %v777
        %v795 = vmul.f32 %v779, %v778
        %v796 = vpack.c.bf16 %v780, %v780
        %v797 = vpack.c.bf16 %v781, %v781
        %v798 = vpack.c.bf16 %v782, %v782
        %v799 = vpack.c.bf16 %v783, %v783
        %v800 = vpack.c.bf16 %v784, %v784
        %v801 = vpack.c.bf16 %v785, %v785
        %v802 = vpack.c.bf16 %v786, %v786
        %v803 = vpack.c.bf16 %v787, %v787
        %v804 = vpack.c.bf16 %v788, %v788
        %v805 = vpack.c.bf16 %v789, %v789
        %v806 = vpack.c.bf16 %v790, %v790
        %v807 = vpack.c.bf16 %v791, %v791
        %v808 = vpack.c.bf16 %v792, %v792
        %v809 = vpack.c.bf16 %v793, %v793
        %v810 = vpack.c.bf16 %v794, %v794
        %v811 = vpack.c.bf16 %v795, %v795
        %812 = vst [vmem:[#allocation3] sm:$0xf] %v796
        %813 = vst [vmem:[#allocation3 + $0x4] sm:$0xf] %v797
        %814 = vst [vmem:[#allocation3 + $0x8] sm:$0xf] %v798
        %815 = vst [vmem:[#allocation3 + $0xc] sm:$0xf] %v799
        %816 = vst [vmem:[#allocation3 + $0x10] sm:$0xf] %v800
        %817 = vst [vmem:[#allocation3 + $0x14] sm:$0xf] %v801
        %818 = vst [vmem:[#allocation3 + $0x18] sm:$0xf] %v802
        %819 = vst [vmem:[#allocation3 + $0x1c] sm:$0xf] %v803
        %820 = vst [vmem:[#allocation3 + $0x20] sm:$0xf] %v804
        %821 = vst [vmem:[#allocation3 + $0x24] sm:$0xf] %v805
        %822 = vst [vmem:[#allocation3 + $0x28] sm:$0xf] %v806
        %823 = vst [vmem:[#allocation3 + $0x2c] sm:$0xf] %v807
        %824 = vst [vmem:[#allocation3 + $0x30] sm:$0xf] %v808
        %825 = vst [vmem:[#allocation3 + $0x34] sm:$0xf] %v809
        %826 = vst [vmem:[#allocation3 + $0x38] sm:$0xf] %v810
        %827 = vst [vmem:[#allocation3 + $0x3c] sm:$0xf] %v811
        %v828 = vld [vmem:[%s143] sm:$0xff]
        %v829 = vld [vmem:[%s143 + $0x8] sm:$0xff]
        %v830 = vld [vmem:[%s143 + $0x10] sm:$0xff]
        %v831 = vld [vmem:[%s143 + $0x18] sm:$0xff]
        %v832 = vld [vmem:[%s143 + $0x20] sm:$0xff]
        %v833 = vld [vmem:[%s143 + $0x28] sm:$0xff]
        %v834 = vld [vmem:[%s143 + $0x30] sm:$0xff]
        %v835 = vld [vmem:[%s143 + $0x38] sm:$0xff]
        %v836 = vld [vmem:[%s143 + $0x40] sm:$0xff]
        %v837 = vld [vmem:[%s143 + $0x48] sm:$0xff]
        %v838 = vld [vmem:[%s143 + $0x50] sm:$0xff]
        %v839 = vld [vmem:[%s143 + $0x58] sm:$0xff]
        %v840 = vld [vmem:[%s143 + $0x60] sm:$0xff]
        %v841 = vld [vmem:[%s143 + $0x68] sm:$0xff]
        %v842 = vld [vmem:[%s143 + $0x70] sm:$0xff]
        %v843 = vld [vmem:[%s143 + $0x78] sm:$0xff]
        %v844 = vld [vmem:[%s143 + $0x80] sm:$0xff]
        %v845 = vld [vmem:[%s143 + $0x88] sm:$0xff]
        %v846 = vld [vmem:[%s143 + $0x90] sm:$0xff]
        %v847 = vld [vmem:[%s143 + $0x98] sm:$0xff]
        %v848 = vld [vmem:[%s143 + $0xa0] sm:$0xff]
        %v849 = vld [vmem:[%s143 + $0xa8] sm:$0xff]
        %v850 = vld [vmem:[%s143 + $0xb0] sm:$0xff]
        %v851 = vld [vmem:[%s143 + $0xb8] sm:$0xff]
        %v852 = vld [vmem:[%s143 + $0xc0] sm:$0xff]
        %v853 = vld [vmem:[%s143 + $0xc8] sm:$0xff]
        %v854 = vld [vmem:[%s143 + $0xd0] sm:$0xff]
        %v855 = vld [vmem:[%s143 + $0xd8] sm:$0xff]
        %v856 = vld [vmem:[%s143 + $0xe0] sm:$0xff]
        %v857 = vld [vmem:[%s143 + $0xe8] sm:$0xff]
        %v858 = vld [vmem:[%s143 + $0xf0] sm:$0xff]
        %v859 = vld [vmem:[%s143 + $0xf8] sm:$0xff]
        %v860 = vld [vmem:[#allocation3] sm:$0xf]
        %v861 = vld [vmem:[#allocation3 + $0x4] sm:$0xf]
        %v862 = vld [vmem:[#allocation3 + $0x8] sm:$0xf]
        %v863 = vld [vmem:[#allocation3 + $0xc] sm:$0xf]
        %v864 = vld [vmem:[#allocation3 + $0x10] sm:$0xf]
        %v865 = vld [vmem:[#allocation3 + $0x14] sm:$0xf]
        %v866 = vld [vmem:[#allocation3 + $0x18] sm:$0xf]
        %v867 = vld [vmem:[#allocation3 + $0x1c] sm:$0xf]
        %v868 = vld [vmem:[#allocation3 + $0x20] sm:$0xf]
        %v869 = vld [vmem:[#allocation3 + $0x24] sm:$0xf]
        %v870 = vld [vmem:[#allocation3 + $0x28] sm:$0xf]
        %v871 = vld [vmem:[#allocation3 + $0x2c] sm:$0xf]
        %v872 = vld [vmem:[#allocation3 + $0x30] sm:$0xf]
        %v873 = vld [vmem:[#allocation3 + $0x34] sm:$0xf]
        %v874 = vld [vmem:[#allocation3 + $0x38] sm:$0xf]
        %v875 = vld [vmem:[#allocation3 + $0x3c] sm:$0xf]
        %v876 = vpack.c.bf16 %v830, %v828
        %v877 = vpack.c.bf16 %v831, %v829
        %v878 = vpack.c.bf16 %v834, %v832
        %v879 = vpack.c.bf16 %v835, %v833
        %v880 = vpack.c.bf16 %v838, %v836
        %v881 = vpack.c.bf16 %v839, %v837
        %v882 = vpack.c.bf16 %v842, %v840
        %v883 = vpack.c.bf16 %v843, %v841
        %v884 = vpack.c.bf16 %v846, %v844
        %v885 = vpack.c.bf16 %v847, %v845
        %v886 = vpack.c.bf16 %v850, %v848
        %v887 = vpack.c.bf16 %v851, %v849
        %v888 = vpack.c.bf16 %v854, %v852
        %v889 = vpack.c.bf16 %v855, %v853
        %v890 = vpack.c.bf16 %v858, %v856
        %v891 = vpack.c.bf16 %v859, %v857
        %v908 = vunpack.c.l.b16 %v860
        %v909 = vunpack.c.l.b16 %v861
        %v910 = vunpack.c.l.b16 %v862
        %v911 = vunpack.c.l.b16 %v863
        %v912 = vunpack.c.l.b16 %v864
        %v913 = vunpack.c.l.b16 %v865
        %v914 = vunpack.c.l.b16 %v866
        %v915 = vunpack.c.l.b16 %v867
        %v916 = vunpack.c.l.b16 %v868
        %v917 = vunpack.c.l.b16 %v869
        %v918 = vunpack.c.l.b16 %v870
        %v919 = vunpack.c.l.b16 %v871
        %v920 = vunpack.c.l.b16 %v872
        %v921 = vunpack.c.l.b16 %v873
        %v922 = vunpack.c.l.b16 %v874
        %v923 = vunpack.c.l.b16 %v875
        %v924 = vpack.c.b16 %v909, %v908
        %v925 = vpack.c.b16 %v911, %v910
        %v926 = vpack.c.b16 %v913, %v912
        %v927 = vpack.c.b16 %v915, %v914
        %v928 = vpack.c.b16 %v917, %v916
        %v929 = vpack.c.b16 %v919, %v918
        %v930 = vpack.c.b16 %v921, %v920
        %v931 = vpack.c.b16 %v923, %v922
        %940 = vmatpush.bf16.msra.mxu0 %v890
        %941 = vmatpush.bf16.msra.mxu0 %v888
        %942 = vmatpush.bf16.msra.mxu0 %v886
        %943 = vmatpush.bf16.msra.mxu0 %v884
        %944 = vmatpush.bf16.msra.mxu0 %v882
        %945 = vmatpush.bf16.msra.mxu0 %v880
        %946 = vmatpush.bf16.msra.mxu0 %v878
        %947 = vmatpush.bf16.msra.mxu0 %v876
        %948 = vmatmul.bf16.gmra.mxu0 %v924
        %v949 = vpop.f32.mrf.mxu0
        %v950 = vadd.f32 %v828, %v949
        %v951 = vpop.f32.mrf.mxu0
        %v952 = vadd.f32 %v830, %v951
        %953 = vmatmul.bf16.gmra.mxu0 %v925
        %v954 = vpop.f32.mrf.mxu0
        %v955 = vadd.f32 %v832, %v954
        %v956 = vpop.f32.mrf.mxu0
        %v957 = vadd.f32 %v834, %v956
        %958 = vmatmul.bf16.gmra.mxu0 %v926
        %v959 = vpop.f32.mrf.mxu0
        %v960 = vadd.f32 %v836, %v959
        %v961 = vpop.f32.mrf.mxu0
        %v962 = vadd.f32 %v838, %v961
        %963 = vmatmul.bf16.gmra.mxu0 %v927
        %v964 = vpop.f32.mrf.mxu0
        %v965 = vadd.f32 %v840, %v964
        %v966 = vpop.f32.mrf.mxu0
        %v967 = vadd.f32 %v842, %v966
        %968 = vmatmul.bf16.gmra.mxu0 %v928
        %v969 = vpop.f32.mrf.mxu0
        %v970 = vadd.f32 %v844, %v969
        %v971 = vpop.f32.mrf.mxu0
        %v972 = vadd.f32 %v846, %v971
        %973 = vmatmul.bf16.gmra.mxu0 %v929
        %v974 = vpop.f32.mrf.mxu0
        %v975 = vadd.f32 %v848, %v974
        %v976 = vpop.f32.mrf.mxu0
        %v977 = vadd.f32 %v850, %v976
        %978 = vmatmul.bf16.gmra.mxu0 %v930
        %v979 = vpop.f32.mrf.mxu0
        %v980 = vadd.f32 %v852, %v979
        %v981 = vpop.f32.mrf.mxu0
        %v982 = vadd.f32 %v854, %v981
        %983 = vmatmul.bf16.gmra.mxu0 %v931
        %v984 = vpop.f32.mrf.mxu0
        %v985 = vadd.f32 %v856, %v984
        %v986 = vpop.f32.mrf.mxu0
        %v987 = vadd.f32 %v858, %v986
        %988 = vdwg.mxu0
        %989 = vmatpush.bf16.msra.mxu0 %v891
        %990 = vmatpush.bf16.msra.mxu0 %v889
        %991 = vmatpush.bf16.msra.mxu0 %v887
        %992 = vmatpush.bf16.msra.mxu0 %v885
        %993 = vmatpush.bf16.msra.mxu0 %v883
        %994 = vmatpush.bf16.msra.mxu0 %v881
        %995 = vmatpush.bf16.msra.mxu0 %v879
        %996 = vmatpush.bf16.msra.mxu0 %v877
        %997 = vmatmul.bf16.gmra.mxu0 %v924
        %v998 = vpop.f32.mrf.mxu0
        %v999 = vadd.f32 %v829, %v998
        %v1000 = vpop.f32.mrf.mxu0
        %v1001 = vadd.f32 %v831, %v1000
        %1002 = vmatmul.bf16.gmra.mxu0 %v925
        %v1003 = vpop.f32.mrf.mxu0
        %v1004 = vadd.f32 %v833, %v1003
        %v1005 = vpop.f32.mrf.mxu0
        %v1006 = vadd.f32 %v835, %v1005
        %1007 = vmatmul.bf16.gmra.mxu0 %v926
        %v1008 = vpop.f32.mrf.mxu0
        %v1009 = vadd.f32 %v837, %v1008
        %v1010 = vpop.f32.mrf.mxu0
        %v1011 = vadd.f32 %v839, %v1010
        %1012 = vmatmul.bf16.gmra.mxu0 %v927
        %v1013 = vpop.f32.mrf.mxu0
        %v1014 = vadd.f32 %v841, %v1013
        %v1015 = vpop.f32.mrf.mxu0
        %v1016 = vadd.f32 %v843, %v1015
        %1017 = vmatmul.bf16.gmra.mxu0 %v928
        %v1018 = vpop.f32.mrf.mxu0
        %v1019 = vadd.f32 %v845, %v1018
        %v1020 = vpop.f32.mrf.mxu0
        %v1021 = vadd.f32 %v847, %v1020
        %1022 = vmatmul.bf16.gmra.mxu0 %v929
        %v1023 = vpop.f32.mrf.mxu0
        %v1024 = vadd.f32 %v849, %v1023
        %v1025 = vpop.f32.mrf.mxu0
        %v1026 = vadd.f32 %v851, %v1025
        %1027 = vmatmul.bf16.gmra.mxu0 %v930
        %v1028 = vpop.f32.mrf.mxu0
        %v1029 = vadd.f32 %v853, %v1028
        %v1030 = vpop.f32.mrf.mxu0
        %v1031 = vadd.f32 %v855, %v1030
        %1032 = vmatmul.bf16.gmra.mxu0 %v931
        %v1033 = vpop.f32.mrf.mxu0
        %v1034 = vadd.f32 %v857, %v1033
        %v1035 = vpop.f32.mrf.mxu0
        %v1036 = vadd.f32 %v859, %v1035
        %1037 = vdwg.mxu0
        %1038 = vst [vmem:[%s164] sm:$0xff] %v950
        %1039 = vst [vmem:[%s164 + $0x8] sm:$0xff] %v999
        %1040 = vst [vmem:[%s164 + $0x10] sm:$0xff] %v952
        %1041 = vst [vmem:[%s164 + $0x18] sm:$0xff] %v1001
        %1042 = vst [vmem:[%s164 + $0x20] sm:$0xff] %v955
        %1043 = vst [vmem:[%s164 + $0x28] sm:$0xff] %v1004
        %1044 = vst [vmem:[%s164 + $0x30] sm:$0xff] %v957
        %1045 = vst [vmem:[%s164 + $0x38] sm:$0xff] %v1006
        %1046 = vst [vmem:[%s164 + $0x40] sm:$0xff] %v960
        %1047 = vst [vmem:[%s164 + $0x48] sm:$0xff] %v1009
        %1048 = vst [vmem:[%s164 + $0x50] sm:$0xff] %v962
        %1049 = vst [vmem:[%s164 + $0x58] sm:$0xff] %v1011
        %1050 = vst [vmem:[%s164 + $0x60] sm:$0xff] %v965
        %1051 = vst [vmem:[%s164 + $0x68] sm:$0xff] %v1014
        %1052 = vst [vmem:[%s164 + $0x70] sm:$0xff] %v967
        %1053 = vst [vmem:[%s164 + $0x78] sm:$0xff] %v1016
        %1054 = vst [vmem:[%s164 + $0x80] sm:$0xff] %v970
        %1055 = vst [vmem:[%s164 + $0x88] sm:$0xff] %v1019
        %1056 = vst [vmem:[%s164 + $0x90] sm:$0xff] %v972
        %1057 = vst [vmem:[%s164 + $0x98] sm:$0xff] %v1021
        %1058 = vst [vmem:[%s164 + $0xa0] sm:$0xff] %v975
        %1059 = vst [vmem:[%s164 + $0xa8] sm:$0xff] %v1024
        %1060 = vst [vmem:[%s164 + $0xb0] sm:$0xff] %v977
        %1061 = vst [vmem:[%s164 + $0xb8] sm:$0xff] %v1026
        %1062 = vst [vmem:[%s164 + $0xc0] sm:$0xff] %v980
        %1063 = vst [vmem:[%s164 + $0xc8] sm:$0xff] %v1029
        %1064 = vst [vmem:[%s164 + $0xd0] sm:$0xff] %v982
        %1065 = vst [vmem:[%s164 + $0xd8] sm:$0xff] %v1031
        %1066 = vst [vmem:[%s164 + $0xe0] sm:$0xff] %v985
        %1067 = vst [vmem:[%s164 + $0xe8] sm:$0xff] %v1034
        %1068 = vst [vmem:[%s164 + $0xf0] sm:$0xff] %v987
        %1069 = vst [vmem:[%s164 + $0xf8] sm:$0xff] %v1036
        %s1070 = sand.u32 %s75, 1
        %s1071 = scalar_lea.sflag [#allocation7], %s1070
        %s1072 = sand.u32 %s75, 1
        %s1073 = smul.addr %s1072, 256
        %s1074 = scalar_lea.vmem [#allocation8], %s1073
        // Predicated region
        $region33: #{tpu_custom_call.1} parent=27 // pred_check
          %p1075 = pneg %p85
        $region34: #{tpu_custom_call.1} parent=27 // pred_check_branch
          %1077 = sbr.rel (%p1075) target = $region36
        $region35: #{tpu_custom_call.1} parent=27 // pred_region
          %1079 = vsyncadd %s1071, 0
          %s1080 = smul.addr %s20, 32
          %s1081 = smul.addr %s1080, 8
          %s1082 = scalar_lea.hbm %s2, %s1081
          %s1083 = sshll.u32 %s1074, 4
          %s1084 = int_to_ptr.vmem [resolvable:$true] %s1083
          %s1085 = sshll.u32 %s1082, 4
          %s1086 = int_to_ptr.hbm [resolvable:$true] %s1085
          %1091 = dma.vmem_to_hbm [thread:$0]  %s1084, 4096, %s1086, %s1071, 256, 256, 16
        $region36: #{tpu_custom_call.1} parent=27 // pred_fallthru
          _
      $region28: #{tpu_custom_call.1} parent=5 // pred_fallthru
        _
      %p1092 = scmp.le.s32.totalorder 2, %s15
      // Predicated region
      $region37: #{tpu_custom_call.1} parent=5 // pred_check
        %p1093 = pneg %p1092
      $region38: #{tpu_custom_call.1} parent=5 // pred_check_branch
        %1095 = sbr.rel (%p1093) target = $region40
      $region39: #{tpu_custom_call.1} parent=5 // pred_region
        %s1096 = ssub.s32 %s15, 2
        // Predicated region
        $region41: #{tpu_custom_call.1} parent=39 // pred_check
          %p1097 = pneg %p91
        $region42: #{tpu_custom_call.1} parent=39 // pred_check_branch
          %1099 = sbr.rel (%p1097) target = $region44
        $region43: #{tpu_custom_call.1} parent=39 // pred_region
          %s1100 = sand.u32 %s76, 1
          %s1101 = scalar_lea.sflag [#allocation7], %s1100
          %s1102 = sand.u32 %s76, 1
          %s1103 = smul.addr %s1102, 256
          %s1104 = scalar_lea.vmem [#allocation8], %s1103
          %1106 = dma.done %s1101, 4096
        $region44: #{tpu_custom_call.1} parent=39 // pred_fallthru
          _
      $region40: #{tpu_custom_call.1} parent=5 // pred_fallthru
        _
    $region6: #{tpu_custom_call.1} parent=1 // loop_footer
      %s19 = sadd.s32 1, %s15
    $region7: #{tpu_custom_call.1} parent=1 // loop_footer_branch
      %14 = sbr.rel target = $region3
    $region8: #{tpu_custom_call.1} parent=1 // loop_exit
      _
    %1107 = vsyncpa [#allocation6], 1
    %s1108 = scalar_lea.sflag [#allocation6], 1
    %1109 = vsyncpa %s1108, 1
    %1110 = vsyncpa [#allocation7], 1
    %s1111 = scalar_lea.sflag [#allocation7], 1
    %1112 = vsyncpa %s1111, 1

</llo_original>
